<compile_context>
chip_gen: v6e
topology: v6e:2x2x1
jax: 0.10.0
libtpu: 0.0.40
codegen_flags: <defaults>
</compile_context>

<pallas_src>
import math

import numpy as np

import jax
import jax.numpy as jnp
from jax.experimental import pallas as pl
from jax.experimental.pallas import tpu as pltpu


# ---------------------------------------------------------------------------
# Path A (default materialize): direct HBM -> HBM DMA copy, zero VMEM staging.
# ---------------------------------------------------------------------------
def _dma_copy(A):
    orig_shape = A.shape
    x = A if A.ndim >= 1 else A.reshape(1)
    lead = x.shape[0]
    nchunks = max(1, min(4, lead))  # 2-4 DMAs in flight saturate HBM read+write
    bounds = [(i * lead) // nchunks for i in range(nchunks + 1)]
    chunks = tuple(
        (s, e - s) for s, e in zip(bounds[:-1], bounds[1:]) if e > s
    )
    n = len(chunks)
    nbytes = x.size * x.dtype.itemsize

    def kernel(x_hbm, o_hbm, sem):
        # Issue all chunked HBM->HBM copies, then wait on all of them, so
        # several DMAs stay in flight (no VMEM pass, no per-grid-step cost).
        for c, (start, size) in enumerate(chunks):
            pltpu.make_async_copy(
                x_hbm.at[pl.ds(start, size)],
                o_hbm.at[pl.ds(start, size)],
                sem.at[c],
            ).start()
        for c, (start, size) in enumerate(chunks):
            pltpu.make_async_copy(
                x_hbm.at[pl.ds(start, size)],
                o_hbm.at[pl.ds(start, size)],
                sem.at[c],
            ).wait()

    out = pl.pallas_call(
        kernel,
        out_shape=jax.ShapeDtypeStruct(x.shape, x.dtype),
        in_specs=[pl.BlockSpec(memory_space=pl.ANY)],
        out_specs=pl.BlockSpec(memory_space=pl.ANY),
        scratch_shapes=[pltpu.SemaphoreType.DMA((n,))],
        cost_estimate=pl.CostEstimate(
            flops=0, transcendentals=0, bytes_accessed=2 * nbytes
        ),
    )(x)
    return out.reshape(orig_shape)


# ---------------------------------------------------------------------------
# Path B (method="vmem"): BlockSpec-pipelined lane-dense VMEM copy.
# ---------------------------------------------------------------------------
def _copy_kernel(x_ref, o_ref):
    o_ref[...] = x_ref[...]


_DEFAULT_BLOCK_BYTES = 2 * 1024 * 1024  # safe on v5e's 16 MiB scoped default
_SUBLANE_ALIGN = {4: 8, 2: 16, 1: 32}   # packed sublane count per itemsize


def _block_bytes_and_vmem_limit():
    """Generation-aware block budget (and explicit VMEM limit for v7x)."""
    blk, limit = _DEFAULT_BLOCK_BYTES, None
    try:
        info = pltpu.get_tpu_info()
        vmem = getattr(info, "vmem_capacity_bytes", None)
        if vmem is not None and vmem <= 64 * 1024 * 1024:
            # v7x-class (64 MiB VMEM, ~3.2 TB/s HBM): bigger blocks amortize
            # the ~0.35us per-grid-step overhead; in+out double-buffered at
            # 4 MiB blocks = 16 MiB, under the 32 MiB scoped default.
            blk = 4 * 1024 * 1024
            limit = 32 * 1024 * 1024
        # v5e / v6e (128 MiB VMEM): keep 2 MiB blocks; 4 x 2 MiB pipelined
        # buffers = 8 MiB, inside v5e's 16 MiB scoped-VMEM default.
    except Exception:
        pass
    return blk, limit


def _pallas_copy_2d(x2d, *, donate):
    rows, cols = x2d.shape
    itemsize = x2d.dtype.itemsize
    align = _SUBLANE_ALIGN.get(itemsize, 8)
    blk_bytes, vmem_limit = _block_bytes_and_vmem_limit()
    total_bytes = rows * cols * itemsize

    # Lane-axis tiling: keep blocks lane-dense (multiples of 128) and bounded
    # so one align-row stripe never exceeds the block budget (avoids a silent
    # VMEM blow-up for very wide folded rows).
    if cols % 128 == 0 and cols * itemsize * align > blk_bytes:
        block_cols = max(128, (blk_bytes // (align * itemsize)) // 128 * 128)
        block_cols = min(block_cols, cols)
    else:
        block_cols = cols  # full array extent is always a legal block shape

    bytes_per_stripe = block_cols * itemsize
    block_rows = max(align, (blk_bytes // bytes_per_stripe) // align * align)
    if block_rows >= rows:
        if total_bytes > 4 * 1024 * 1024 and rows >= 2 * align:
            # Guarantee >=2 grid steps so both v7x TensorCores get work under
            # dimension_semantics=("parallel", ...). Neutral on v5e/v6e.
            half = (rows + 1) // 2
            block_rows = ((half + align - 1) // align) * align
            if block_rows >= rows:
                block_rows = rows
        else:
            block_rows = rows

    grid = (pl.cdiv(rows, block_rows), pl.cdiv(cols, block_cols))
    spec = pl.BlockSpec((block_rows, block_cols), lambda i, j: (i, j))

    kwargs = {}
    if donate:
        # Only alias when the caller actually donates A; otherwise XLA inserts
        # a protective copy and the materialize path pays ~3x HBM traffic.
        kwargs["input_output_aliases"] = {0: 0}

    return pl.pallas_call(
        _copy_kernel,
        out_shape=jax.ShapeDtypeStruct(x2d.shape, x2d.dtype),
        grid=grid,
        in_specs=[spec],
        out_specs=spec,
        compiler_params=pltpu.CompilerParams(
            dimension_semantics=("parallel", "parallel"),
            vmem_limit_bytes=vmem_limit,
        ),
        cost_estimate=pl.CostEstimate(
            flops=0, transcendentals=0, bytes_accessed=2 * total_bytes
        ),
        **kwargs,
    )(x2d)


def _vmem_copy(A, *, donate):
    total = math.prod(A.shape) if A.shape else 1
    # Primary fold: lane-dense 2D slab [rows, k*128] -> unmasked full-lane vst.
    for lanes in (512, 256, 128):
        if total % lanes == 0 and total >= lanes:
            x2d = A.reshape(total // lanes, lanes)
            return _pallas_copy_2d(x2d, donate=donate).reshape(A.shape)
    # Fallback (total not a multiple of 128): fold to [rows, last] and pad the
    # lane axis up to a multiple of 128 so stores stay unmasked, then slice
    # back.  (Trades one XLA pad+slice for lane-dense stores on this rare,
    # small-array path.)
    last = A.shape[-1] if A.ndim else 1
    rows = max(1, total // last)
    x2d = A.reshape(rows, last)
    pad = (-last) % 128
    xp = jnp.pad(x2d, ((0, 0), (0, pad)))
    out = _pallas_copy_2d(xp, donate=donate)[:, :last]
    return out.reshape(A.shape)


# ---------------------------------------------------------------------------
# Public entry point (forward-pass semantics of Sampler.forward).
# ---------------------------------------------------------------------------
def sampler_forward(A, lengths=None, training_mode=None, *, materialize=False,
                    method="dma", donate=False):
    """Pallas equivalent of Sampler.forward for the identity sampler.

    `lengths` / `training_mode` are accepted for signature parity with the
    PyTorch module and ignored (both train and eval branches return A).

    Default: zero-copy -- returns A unchanged (no HBM traffic at all).
    materialize=True: routes A through a Pallas kernel producing a fresh
    buffer. method="dma" (default) uses a direct HBM->HBM DMA copy (zero VMEM
    staging); method="vmem" uses the BlockSpec-pipelined lane-dense copy.
    donate=True (vmem path) enables input_output_aliases={0:0}; only pass it
    when the caller actually donates A's buffer.
    """
    del lengths, training_mode  # identity: both branches return A unchanged
    # TODO(synk): forward_train/forward_eval/batch_eval are abstract
    # (NotImplementedError) in the reference; concrete noisy/Gumbel sampling
    # variants would plug in here.
    if not materialize:
        return A
    if A.size == 0:
        return A
    if method == "dma":
        return _dma_copy(A)
    return _vmem_copy(A, donate=donate)


if __name__ == "__main__":
    key = jax.random.PRNGKey(0)
    B, S = 2, 8
    # Arc matrix A: [batch, seq, seq]
    A = jax.random.normal(key, (B, S, S), dtype=jnp.float32)
    lengths = jnp.full((B,), S, dtype=jnp.int32)  # parity with torch API, ignored

    A_host = np.asarray(jax.device_get(A))

    # Path 1: default zero-copy identity.
    out0 = jax.block_until_ready(sampler_forward(A, lengths, training_mode=True))
    assert out0.shape == A.shape and out0.dtype == A.dtype
    assert np.array_equal(np.asarray(jax.device_get(out0)), A_host)

    # Path 2: materialize via direct HBM->HBM DMA (default materialize path).
    out1 = jax.block_until_ready(
        sampler_forward(A, lengths, training_mode=False, materialize=True)
    )
    assert out1.shape == A.shape and out1.dtype == A.dtype
    assert np.array_equal(np.asarray(jax.device_get(out1)), A_host)

    # Path 3: materialize via the lane-dense VMEM copy kernel (no aliasing).
    out2 = jax.block_until_ready(
        sampler_forward(A, lengths, materialize=True, method="vmem")
    )
    assert np.array_equal(np.asarray(jax.device_get(out2)), A_host)

    # Path 4: larger f32 slab (8 MiB) -> multi-step grid + >=2-step guarantee
    # on both paths.
    A2 = jax.random.normal(jax.random.PRNGKey(0), (8, 512, 512), dtype=jnp.float32)
    A2_host = np.asarray(jax.device_get(A2))
    out3 = jax.block_until_ready(sampler_forward(A2, materialize=True))
    out4 = jax.block_until_ready(sampler_forward(A2, materialize=True, method="vmem"))
    assert np.array_equal(np.asarray(jax.device_get(out3)), A2_host)
    assert np.array_equal(np.asarray(jax.device_get(out4)), A2_host)

    # Path 5: bf16 input -> dtype-aware (16-row) sublane alignment.
    A3 = jax.random.normal(jax.random.PRNGKey(0), (2, 128, 96)).astype(jnp.bfloat16)
    A3_host = np.asarray(jax.device_get(A3))
    out5 = jax.block_until_ready(sampler_forward(A3, materialize=True, method="vmem"))
    out6 = jax.block_until_ready(sampler_forward(A3, materialize=True))
    assert np.array_equal(np.asarray(jax.device_get(out5)), A3_host)
    assert np.array_equal(np.asarray(jax.device_get(out6)), A3_host)

    # Path 6: odd shape (total % 128 != 0) -> hardened padded-lane fallback.
    A4 = jax.random.normal(jax.random.PRNGKey(0), (3, 5, 7), dtype=jnp.float32)
    A4_host = np.asarray(jax.device_get(A4))
    out7 = jax.block_until_ready(sampler_forward(A4, materialize=True, method="vmem"))
    out8 = jax.block_until_ready(sampler_forward(A4, materialize=True))
    assert np.array_equal(np.asarray(jax.device_get(out7)), A4_host)
    assert np.array_equal(np.asarray(jax.device_get(out8)), A4_host)

    # Path 7: explicit donate=True requests input/output aliasing on the VMEM
    # path (eager call here, so JAX keeps the caller's A5 valid).
    A5 = jax.random.normal(jax.random.PRNGKey(0), (2, 8, 128), dtype=jnp.float32)
    A5_host = np.asarray(jax.device_get(A5))
    out9 = jax.block_until_ready(
        sampler_forward(A5, materialize=True, method="vmem", donate=True)
    )
    assert np.array_equal(np.asarray(jax.device_get(out9)), A5_host)

    print("KERNEL_OK")
</pallas_src>

<mosaic_0001>
module attributes {stable_mosaic.version = 11 : i64} {
  func.func @kernel(%arg0: memref<2x8x8xf32, #tpu.memory_space<any>>, %arg1: memref<2x8x8xf32, #tpu.memory_space<any>>, %arg2: memref<2x!tpu.dma_semaphore, #tpu.memory_space<semaphore_mem>>) attributes {dimension_semantics = [], scalar_prefetch = 0 : i64, scratch_operands = 1 : i64, tpu.core_type = #tpu.core_type<tc>} {
    %c0_i32 = arith.constant 0 : i32
    %c0_i32_0 = arith.constant 0 : i32
    %c0_i32_1 = arith.constant 0 : i32
    %c0_i32_2 = arith.constant 0 : i32
    %0 = tpu.memref_slice %arg0[%c0_i32_0, %c0_i32_1, %c0_i32_2] : memref<2x8x8xf32, #tpu.memory_space<any>> -> memref<1x8x8xf32, #tpu.memory_space<any>>
    %c0_i32_3 = arith.constant 0 : i32
    %c0_i32_4 = arith.constant 0 : i32
    %c0_i32_5 = arith.constant 0 : i32
    %1 = tpu.memref_slice %arg1[%c0_i32_3, %c0_i32_4, %c0_i32_5] : memref<2x8x8xf32, #tpu.memory_space<any>> -> memref<1x8x8xf32, #tpu.memory_space<any>>
    %2 = tpu.memref_slice %arg2[%c0_i32] : memref<2x!tpu.dma_semaphore, #tpu.memory_space<semaphore_mem>> -> memref<1x!tpu.dma_semaphore, #tpu.memory_space<semaphore_mem>>
    %3 = tpu.memref_squeeze %2 : memref<1x!tpu.dma_semaphore, #tpu.memory_space<semaphore_mem>> -> memref<!tpu.dma_semaphore, #tpu.memory_space<semaphore_mem>>
    tpu.enqueue_dma source(%0 : memref<1x8x8xf32, #tpu.memory_space<any>>) target(%1 : memref<1x8x8xf32, #tpu.memory_space<any>>) target_semaphore(%3 : memref<!tpu.dma_semaphore, #tpu.memory_space<semaphore_mem>>)
    %c1_i32 = arith.constant 1 : i32
    %c1_i32_6 = arith.constant 1 : i32
    %c0_i32_7 = arith.constant 0 : i32
    %c0_i32_8 = arith.constant 0 : i32
    %4 = tpu.memref_slice %arg0[%c1_i32_6, %c0_i32_7, %c0_i32_8] : memref<2x8x8xf32, #tpu.memory_space<any>> -> memref<1x8x8xf32, #tpu.memory_space<any>>
    %c1_i32_9 = arith.constant 1 : i32
    %c0_i32_10 = arith.constant 0 : i32
    %c0_i32_11 = arith.constant 0 : i32
    %5 = tpu.memref_slice %arg1[%c1_i32_9, %c0_i32_10, %c0_i32_11] : memref<2x8x8xf32, #tpu.memory_space<any>> -> memref<1x8x8xf32, #tpu.memory_space<any>>
    %6 = tpu.memref_slice %arg2[%c1_i32] : memref<2x!tpu.dma_semaphore, #tpu.memory_space<semaphore_mem>> -> memref<1x!tpu.dma_semaphore, #tpu.memory_space<semaphore_mem>>
    %7 = tpu.memref_squeeze %6 : memref<1x!tpu.dma_semaphore, #tpu.memory_space<semaphore_mem>> -> memref<!tpu.dma_semaphore, #tpu.memory_space<semaphore_mem>>
    tpu.enqueue_dma source(%4 : memref<1x8x8xf32, #tpu.memory_space<any>>) target(%5 : memref<1x8x8xf32, #tpu.memory_space<any>>) target_semaphore(%7 : memref<!tpu.dma_semaphore, #tpu.memory_space<semaphore_mem>>)
    %c0_i32_12 = arith.constant 0 : i32
    %c0_i32_13 = arith.constant 0 : i32
    %c0_i32_14 = arith.constant 0 : i32
    %c0_i32_15 = arith.constant 0 : i32
    %8 = tpu.memref_slice %arg0[%c0_i32_13, %c0_i32_14, %c0_i32_15] : memref<2x8x8xf32, #tpu.memory_space<any>> -> memref<1x8x8xf32, #tpu.memory_space<any>>
    %c0_i32_16 = arith.constant 0 : i32
    %c0_i32_17 = arith.constant 0 : i32
    %c0_i32_18 = arith.constant 0 : i32
    %9 = tpu.memref_slice %arg1[%c0_i32_16, %c0_i32_17, %c0_i32_18] : memref<2x8x8xf32, #tpu.memory_space<any>> -> memref<1x8x8xf32, #tpu.memory_space<any>>
    %10 = tpu.memref_slice %arg2[%c0_i32_12] : memref<2x!tpu.dma_semaphore, #tpu.memory_space<semaphore_mem>> -> memref<1x!tpu.dma_semaphore, #tpu.memory_space<semaphore_mem>>
    %11 = tpu.memref_squeeze %10 : memref<1x!tpu.dma_semaphore, #tpu.memory_space<semaphore_mem>> -> memref<!tpu.dma_semaphore, #tpu.memory_space<semaphore_mem>>
    tpu.wait_dma2 semaphore(%11 : memref<!tpu.dma_semaphore, #tpu.memory_space<semaphore_mem>>) src(%8 : memref<1x8x8xf32, #tpu.memory_space<any>>) dst(%9 : memref<1x8x8xf32, #tpu.memory_space<any>>)
    %c1_i32_19 = arith.constant 1 : i32
    %c1_i32_20 = arith.constant 1 : i32
    %c0_i32_21 = arith.constant 0 : i32
    %c0_i32_22 = arith.constant 0 : i32
    %12 = tpu.memref_slice %arg0[%c1_i32_20, %c0_i32_21, %c0_i32_22] : memref<2x8x8xf32, #tpu.memory_space<any>> -> memref<1x8x8xf32, #tpu.memory_space<any>>
    %c1_i32_23 = arith.constant 1 : i32
    %c0_i32_24 = arith.constant 0 : i32
    %c0_i32_25 = arith.constant 0 : i32
    %13 = tpu.memref_slice %arg1[%c1_i32_23, %c0_i32_24, %c0_i32_25] : memref<2x8x8xf32, #tpu.memory_space<any>> -> memref<1x8x8xf32, #tpu.memory_space<any>>
    %14 = tpu.memref_slice %arg2[%c1_i32_19] : memref<2x!tpu.dma_semaphore, #tpu.memory_space<semaphore_mem>> -> memref<1x!tpu.dma_semaphore, #tpu.memory_space<semaphore_mem>>
    %15 = tpu.memref_squeeze %14 : memref<1x!tpu.dma_semaphore, #tpu.memory_space<semaphore_mem>> -> memref<!tpu.dma_semaphore, #tpu.memory_space<semaphore_mem>>
    tpu.wait_dma2 semaphore(%15 : memref<!tpu.dma_semaphore, #tpu.memory_space<semaphore_mem>>) src(%12 : memref<1x8x8xf32, #tpu.memory_space<any>>) dst(%13 : memref<1x8x8xf32, #tpu.memory_space<any>>)
    return
  }
}

</mosaic_0001>

<llo_original>
// kernel: tpu_custom_call.1
$region0: #{tpu_custom_call.1}
  #allocation0 [shape = 'u32[]', space=smem, size = 0x4, offset = 0x4, fixed_abs, tag = 'smem constant byte address 0x4 - core index']
  #allocation1 [shape = 'u32[144,128]{1,0:T(1,128)}', space=vmem, size = 0x12000, scoped, tag = 'internal scratch']
  #allocation2 [shape = 's32[2]{0}', space=sflag, size = 0x8, scoped, tag = 'scratch operand']
  #allocation3 [shape = 's32[]', space=sflag, size = 0x4, offset = 0, fixed_abs, tag = 'sflag constant byte address 0x0 - dummy sync flag']
  #allocation4 [shape = 'u32[0]{0}', space=smem, size = 0, offset = 0, fixed_abs, tag = 'smem constant byte address 0x0 - null']
  #allocation5 [shape = 's32[]', space=sflag, size = 0x4, offset = 0, fixed_abs, tag = 'sflag constant byte address 0x0 - dummy sync flag']
  #allocation6 [shape = 'u32[0]{0}', space=smem, size = 0, offset = 0, fixed_abs, tag = 'smem constant byte address 0x0 - null']
  %s0 = inlined_call_operand.hbm [shape: f32[2,8,8], index: 0, kind: input, shape index: {}]
  %s1 = inlined_call_operand.hbm [shape: f32[2,8,8], index: 1, kind: output, shape index: {}]
  %s2 = sld [smem:[#allocation0]]
  $region2: #{tpu_custom_call.1} parent=0
    _
  %s4 = ssub.s32 1, %s2
  %s5 = scalar_select 0, %s4, %s2
  %s7 = sshll.u32 1, 14
  %s8 = sxor.u32 4294967295, %s7
  %12 = dma.general %s0, 128, %s1, [#allocation2], 131072, [#allocation4], 0, 0
  %s13 = scalar_lea.hbm %s0, 128
  %s14 = scalar_lea.hbm %s1, 128
  %s15 = scalar_lea.sflag [#allocation2], 1
  %s17 = sshll.u32 1, 14
  %s18 = sxor.u32 4294967295, %s17
  %22 = dma.general %s13, 128, %s14, %s15, 131072, [#allocation6], 0, 0
  %s23 = smul.u32 1, 8
  %s24 = smul.u32 %s23, 1
  %s25 = sshll.u32 %s24, 4
  %26 = dma.done [#allocation2], %s25
  %s27 = sshll.u32 %s24, 4
  %28 = dma.done %s15, %s27
  %29 = vsyncmov [#allocation2]
  %s30 = vpop.sfrf %29
  %p31 = scmp.eq.s32.totalorder %s30, 0
  %p32 = pneg %p31
  %34 = shalt.err (%p32)
  %s35 = scalar_lea.sflag [#allocation2], 1
  %36 = vsyncmov %s35
  %s37 = vpop.sfrf %36
  %p38 = scmp.eq.s32.totalorder %s37, 0
  %p39 = pneg %p38
  %41 = shalt.err (%p39)

</llo_original>
